<compile_context>
chip_gen: v7x
topology: tpu7x:2x2x1
jax: 0.10.0
libtpu: 0.0.40
codegen_flags: <defaults>
</compile_context>

<pallas_src>
import functools

import jax
import jax.numpy as jnp
from jax.experimental import pallas as pl
from jax.experimental.pallas import tpu as pltpu


def _round_up(n, m):
    return ((n + m - 1) // m) * m


def _cdiv(a, b):
    return -(-a // b)


def _sublayer_connection_kernel(x_ref, gamma_ref, w_ref, b_ref, o_ref, *, hidden_size):
    # x_ref: (rt, H) tile of rows in the input's native dtype.
    x = x_ref[...].astype(jnp.float32)

    # ---- LayerNorm (torch.std => unbiased, ddof=1; eps added to std) ----
    mean = jnp.mean(x, axis=-1, keepdims=True)
    diff = x - mean
    var_unbiased = jnp.sum(diff * diff, axis=-1, keepdims=True) * (1.0 / (hidden_size - 1))
    std = jnp.sqrt(var_unbiased)
    # Exact reciprocal: this kernel is HBM-bound, the divide is free and keeps
    # closer parity with the f32 PyTorch reference.
    inv = pl.reciprocal(std + 1e-6, approx=False)          # (rt, 1)
    scaled = (gamma_ref[...] * inv) * diff                  # (rt, H); beta folded into bias

    # ---- sublayer: Linear(H, H) on the MXU, bf16 operands, f32 accumulation ----
    # (bf16 cast of the normalized activations is a deliberate MXU choice.)
    sub = jnp.dot(scaled.astype(jnp.bfloat16), w_ref[...],
                  preferred_element_type=jnp.float32) + b_ref[...]

    # ---- dropout (eval mode -> identity) + residual (f32 accumulate) ----
    o_ref[...] = (x + sub).astype(o_ref.dtype)


def _choose_row_tile(rows, row_tile):
    """Pick a row tile: big (amortizes ~0.35us/step overhead) but with >= 4 grid
    steps when rows allow (so v7x megacore keeps 2 pipelined steps per core)."""
    row_tile = max(8, _round_up(row_tile, 8))
    n_steps = _cdiv(rows, row_tile)
    max_steps = max(1, _cdiv(rows, 8))          # smallest legal tile is 8 rows
    n_steps = min(max(n_steps, 4), max_steps)
    rt = min(_round_up(_cdiv(rows, n_steps), 8), row_tile)
    return rt


def sublayer_connection(x, gamma, beta, w, b, *, row_tile=1024):
    """SublayerConnection forward.

    x: [B, S, H]; gamma/beta: [H] (LayerNorm a_2/b_2); w: [H, H]; b: [H]
    (deterministic Linear sublayer). H should be a multiple of 128 for
    lane-dense stores (the demo uses H=128).
    """
    B, S, H = x.shape
    rows = B * S

    rt = _choose_row_tile(rows, row_tile)
    grid = _cdiv(rows, rt)                      # partial last block, no pad copy

    # Keep x in its native dtype through HBM (kernel casts to f32 internally).
    x2 = x.reshape(rows, H)

    gamma2 = gamma.reshape(1, H).astype(jnp.float32)
    # Fold beta into the linear bias: norm @ W + b == (scale*diff) @ W + (beta @ W + b).
    b_eff = (beta.astype(jnp.float32) @ w.astype(jnp.float32)
             + b.astype(jnp.float32)).reshape(1, H)
    w_bf16 = w.astype(jnp.bfloat16)             # MXU operand; halves W's footprint

    kernel = functools.partial(_sublayer_connection_kernel, hidden_size=H)

    # W residency: double-buffered is fine for small H; single-buffer once it gets big.
    w_buffers = 1 if H >= 2048 else 2
    if w_buffers == 1:
        w_spec = pl.BlockSpec((H, H), lambda i: (0, 0), pipeline_mode=pl.Buffered(1))
    else:
        w_spec = pl.BlockSpec((H, H), lambda i: (0, 0))

    # VMEM budget (generation-aware cap with headroom).
    itemsize = jnp.dtype(x.dtype).itemsize
    vmem_est = (2 * rt * H * itemsize) * 2          # in + out tiles, double-buffered
    vmem_est += w_buffers * H * H * 2               # resident bf16 W
    vmem_est += 2 * 2 * H * 4                       # gamma + b_eff constants
    vmem_est += 4 * rt * H * 4                      # f32 intermediates headroom
    vmem_est += 4 << 20                             # misc slack
    try:
        vmem_cap = int(pltpu.get_tpu_info().vmem_capacity_bytes)
    except Exception:
        vmem_cap = 64 * 1024 * 1024
    vmem_limit = int(min(max(vmem_est, 16 * 1024 * 1024), int(0.75 * vmem_cap)))

    out = pl.pallas_call(
        kernel,
        out_shape=jax.ShapeDtypeStruct((rows, H), x.dtype),
        grid_spec=pltpu.PrefetchScalarGridSpec(
            num_scalar_prefetch=0,
            grid=(grid,),
            in_specs=[
                pl.BlockSpec((rt, H), lambda i: (i, 0)),   # x rows (pipelined)
                pl.BlockSpec((1, H), lambda i: (0, 0)),    # gamma (constant block)
                w_spec,                                    # W (bf16, resident)
                pl.BlockSpec((1, H), lambda i: (0, 0)),    # folded bias
            ],
            out_specs=pl.BlockSpec((rt, H), lambda i: (i, 0)),
        ),
        compiler_params=pltpu.CompilerParams(
            dimension_semantics=("parallel",),   # row tiles shard across TCs (v7x megacore)
            vmem_limit_bytes=vmem_limit,
        ),
    )(x2, gamma2, w_bf16, b_eff)

    return out.reshape(B, S, H)


def _reference(x, gamma, beta, w, b):
    """Pure-JAX f32 reference matching the PyTorch SublayerConnection forward."""
    xf = x.astype(jnp.float32)
    H = x.shape[-1]
    mean = jnp.mean(xf, axis=-1, keepdims=True)
    diff = xf - mean
    var = jnp.sum(diff * diff, axis=-1, keepdims=True) / (H - 1)
    std = jnp.sqrt(var)
    norm = gamma * diff / (std + 1e-6) + beta
    sub = norm @ w.astype(jnp.float32) + b
    return xf + sub


if __name__ == "__main__":
    key = jax.random.PRNGKey(0)
    kg, kbt, kw, kb, kx1, kx2, kx3, kx4 = jax.random.split(key, 8)

    H = 128  # lane-dense hidden size

    # Parameters (deterministic). Non-trivial gamma/beta exercise the scale/shift path.
    gamma = (1.0 + 0.1 * jax.random.normal(kg, (H,))).astype(jnp.float32)
    beta = (0.1 * jax.random.normal(kbt, (H,))).astype(jnp.float32)
    w = (0.02 * jax.random.normal(kw, (H, H))).astype(jnp.float32)
    b = (0.02 * jax.random.normal(kb, (H,))).astype(jnp.float32)

    def check(x, atol, rtol):
        out = jax.block_until_ready(sublayer_connection(x, gamma, beta, w, b))
        ref = _reference(x, gamma, beta, w, b)
        assert out.shape == x.shape
        assert out.dtype == x.dtype
        assert bool(jnp.all(jnp.isfinite(out.astype(jnp.float32))))
        err = float(jnp.max(jnp.abs(out.astype(jnp.float32) - ref)))
        assert jnp.allclose(out.astype(jnp.float32), ref, atol=atol, rtol=rtol), (
            "max abs err = %e" % err)

    # Small shape implied by the module: batch=2, seq=8, hidden=128.
    check(jax.random.normal(kx1, (2, 8, H), dtype=jnp.float32), 2e-2, 2e-2)
    # Row count not a multiple of 8 -> exercises the partial last block path.
    check(jax.random.normal(kx2, (3, 5, H), dtype=jnp.float32), 2e-2, 2e-2)
    # More rows -> exercises the adaptive tile / multi-step parallel grid.
    check(jax.random.normal(kx3, (4, 128, H), dtype=jnp.float32), 2e-2, 2e-2)
    # Native bf16 input stays bf16 through HBM (no wrapper upcast).
    check(jax.random.normal(kx4, (2, 64, H)).astype(jnp.bfloat16), 5e-2, 5e-2)

    print("KERNEL_OK")
</pallas_src>

<mosaic_0001>
module attributes {stable_mosaic.version = 11 : i64} {
  func.func @_sublayer_connection_kernel(%arg0: i32, %arg1: memref<8x128xf32, #tpu.memory_space<vmem>>, %arg2: memref<1x128xf32, #tpu.memory_space<vmem>>, %arg3: memref<128x128xbf16, #tpu.memory_space<vmem>>, %arg4: memref<1x128xf32, #tpu.memory_space<vmem>>, %arg5: memref<8x128xf32, #tpu.memory_space<vmem>>) attributes {dimension_semantics = [#tpu.dimension_semantics<parallel>], iteration_bounds = array<i64: 2>, scalar_prefetch = 0 : i64, scratch_operands = 0 : i64, tpu.core_type = #tpu.core_type<tc>, window_params = [{transform_indices = @transform_0, window_bounds = array<i64: 8, 128>}, {pipeline_mode = #tpu.pipeline_mode<synchronous>, transform_indices = @transform_1, window_bounds = array<i64: 1, 128>}, {pipeline_mode = #tpu.pipeline_mode<synchronous>, transform_indices = @transform_2, window_bounds = array<i64: 128, 128>}, {pipeline_mode = #tpu.pipeline_mode<synchronous>, transform_indices = @transform_3, window_bounds = array<i64: 1, 128>}, {transform_indices = @transform_4, window_bounds = array<i64: 8, 128>}]} {
    %c0 = arith.constant 0 : index
    %c0_0 = arith.constant 0 : index
    %0 = vector.load %arg1[%c0, %c0_0] : memref<8x128xf32, #tpu.memory_space<vmem>>, vector<8x128xf32>
    %cst = arith.constant dense<0.000000e+00> : vector<8xf32>
    %1 = vector.multi_reduction <add>, %0, %cst [1] : vector<8x128xf32> to vector<8xf32>
    %2 = vector.shape_cast %1 : vector<8xf32> to vector<8x1xf32>
    %cst_1 = arith.constant 1.280000e+02 : f32
    %3 = vector.broadcast %cst_1 : f32 to vector<8x1xf32>
    %4 = arith.divf %2, %3 : vector<8x1xf32>
    %5 = vector.broadcast %4 : vector<8x1xf32> to vector<8x128xf32>
    %6 = arith.subf %0, %5 : vector<8x128xf32>
    %7 = arith.mulf %6, %6 : vector<8x128xf32>
    %cst_2 = arith.constant dense<0.000000e+00> : vector<8xf32>
    %8 = vector.multi_reduction <add>, %7, %cst_2 [1] : vector<8x128xf32> to vector<8xf32>
    %9 = vector.shape_cast %8 : vector<8xf32> to vector<8x1xf32>
    %cst_3 = arith.constant 0.00787401571 : f32
    %10 = vector.broadcast %cst_3 : f32 to vector<8x1xf32>
    %11 = arith.mulf %9, %10 : vector<8x1xf32>
    %12 = math.sqrt %11 : vector<8x1xf32>
    %cst_4 = arith.constant 9.99999997E-7 : f32
    %13 = vector.broadcast %cst_4 : f32 to vector<8x1xf32>
    %14 = arith.addf %12, %13 : vector<8x1xf32>
    %15 = tpu.reciprocal %14 : vector<8x1xf32> -> vector<8x1xf32>
    %c0_5 = arith.constant 0 : index
    %c0_6 = arith.constant 0 : index
    %16 = vector.load %arg2[%c0_5, %c0_6] : memref<1x128xf32, #tpu.memory_space<vmem>>, vector<1x128xf32>
    %17 = vector.broadcast %16 : vector<1x128xf32> to vector<8x128xf32>
    %18 = vector.broadcast %15 : vector<8x1xf32> to vector<8x128xf32>
    %19 = arith.mulf %17, %18 : vector<8x128xf32>
    %20 = arith.mulf %19, %6 : vector<8x128xf32>
    %21 = arith.truncf %20 : vector<8x128xf32> to vector<8x128xbf16>
    %c0_7 = arith.constant 0 : index
    %c0_8 = arith.constant 0 : index
    %22 = vector.load %arg3[%c0_7, %c0_8] : memref<128x128xbf16, #tpu.memory_space<vmem>>, vector<128x128xbf16>
    %cst_9 = arith.constant dense<0.000000e+00> : vector<8x128xf32>
    %23 = tpu.matmul %21, %22, %cst_9 {dimension_numbers = #tpu.dot_dimension_numbers<[1], [0], [0], [1], [0, 0, 1, 1], [], []>} : vector<8x128xbf16>, vector<128x128xbf16>, vector<8x128xf32> -> vector<8x128xf32>
    %c0_10 = arith.constant 0 : index
    %c0_11 = arith.constant 0 : index
    %24 = vector.load %arg4[%c0_10, %c0_11] : memref<1x128xf32, #tpu.memory_space<vmem>>, vector<1x128xf32>
    %25 = vector.broadcast %24 : vector<1x128xf32> to vector<8x128xf32>
    %26 = arith.addf %23, %25 : vector<8x128xf32>
    %27 = arith.addf %0, %26 : vector<8x128xf32>
    %c0_12 = arith.constant 0 : index
    %c0_13 = arith.constant 0 : index
    %28 = vector.load %arg5[%c0_12, %c0_13] : memref<8x128xf32, #tpu.memory_space<vmem>>, vector<8x128xf32>
    tpu.vector_store %arg5[%c0_12, %c0_13], %27 {strides = array<i32>} : memref<8x128xf32, #tpu.memory_space<vmem>>, vector<8x128xf32>,
    return
  }
  func.func @transform_0(%arg0: i32) -> (i32, i32) {
    %c0_i32 = arith.constant 0 : i32
    %c0_i32_0 = arith.constant 0 : i32
    return %arg0, %c0_i32 : i32, i32
  }
  func.func @transform_1(%arg0: i32) -> (i32, i32) {
    %c0_i32 = arith.constant 0 : i32
    %c0_i32_0 = arith.constant 0 : i32
    %c0_i32_1 = arith.constant 0 : i32
    return %c0_i32, %c0_i32_0 : i32, i32
  }
  func.func @transform_2(%arg0: i32) -> (i32, i32) {
    %c0_i32 = arith.constant 0 : i32
    %c0_i32_0 = arith.constant 0 : i32
    %c0_i32_1 = arith.constant 0 : i32
    return %c0_i32, %c0_i32_0 : i32, i32
  }
  func.func @transform_3(%arg0: i32) -> (i32, i32) {
    %c0_i32 = arith.constant 0 : i32
    %c0_i32_0 = arith.constant 0 : i32
    %c0_i32_1 = arith.constant 0 : i32
    return %c0_i32, %c0_i32_0 : i32, i32
  }
  func.func @transform_4(%arg0: i32) -> (i32, i32) {
    %c0_i32 = arith.constant 0 : i32
    %c0_i32_0 = arith.constant 0 : i32
    return %arg0, %c0_i32 : i32, i32
  }
}

</mosaic_0001>

<llo_original>
// kernel: tpu_custom_call.1
$region0: #{tpu_custom_call.1}
  #allocation0 [shape = 'u32[]', space=smem, size = 0x4, offset = 0x4, fixed_abs, tag = 'smem constant byte address 0x4 - core index']
  #allocation1 [shape = 'u32[144,128]{1,0:T(1,128)}', space=vmem, size = 0x12000, scoped, tag = 'internal scratch']
  %s0 = inlined_call_operand.hbm [shape: f32[16,128], index: 0, kind: input, shape index: {}]
  %s1 = inlined_call_operand.vmem [shape: f32[1,128], index: 1, kind: input, shape index: {}]
  %s2 = inlined_call_operand.hbm [shape: bf16[128,128], index: 2, kind: input, shape index: {}]
  %s3 = inlined_call_operand.vmem [shape: f32[1,128], index: 3, kind: input, shape index: {}]
  %s4 = inlined_call_operand.hbm [shape: f32[16,128], index: 4, kind: output, shape index: {}]
  %s5 = sld [smem:[#allocation0]]
  $region57: #{tpu_custom_call.1} parent=0
    _
  %s7 = ssub.s32 1, %s5
  %s8 = scalar_select 0, %s7, %s5
  $region1: #{tpu_custom_call.1} parent=0
    #allocation2 [shape = 'u8[8192]{0}', space=vmem, size = 0x2000, scoped, tag = 'input window, operand 0']
    #allocation3 [shape = 's32[2]{0}', space=sflag, size = 0x8, scoped, tag = 'scoped memory for tpu_custom_call.1']
    #allocation4 [shape = 's32[2]{0}', space=sflag, size = 0x8, scoped, tag = 'scoped memory for tpu_custom_call.1']
    #allocation5 [shape = 'u8[32768]{0}', space=vmem, size = 0x8000, scoped, tag = 'input window, operand 2, single buffered']
    #allocation6 [shape = 's32[1]{0}', space=sflag, size = 0x4, scoped, tag = 'scoped memory for tpu_custom_call.1']
    #allocation7 [shape = 'u8[8192]{0}', space=vmem, size = 0x2000, scoped, tag = 'output window, operand 0']
    %9 = vsyncpa [#allocation3], 0
    %s10 = scalar_lea.sflag [#allocation3], 1
    %11 = vsyncpa %s10, 0
    %12 = vsyncpa [#allocation6], 0
    %13 = vsyncpa [#allocation4], 0
    %s14 = scalar_lea.sflag [#allocation4], 1
    %15 = vsyncpa %s14, 0
    loop: start=0, step=1, limit=4
    $region2: #{tpu_custom_call.1} parent=1 // loop_pre_header
      _
    $region3: #{tpu_custom_call.1} parent=1 // loop_header
      %s17 = sphi 0, %s21
      %p18 = scmp.ge.s32.totalorder %s17, 4
      %s27 = sphi 0, %s29
      %s30 = sphi 0, %s27
      %s31 = sphi 0, %s30
      %s47 = sphi 0, %s31
      %s51 = sphi 0, %s51
      %s53 = sphi 0, %s51
      %s54 = sphi 0, %s53
      %s68 = sphi 0, %s54
      %s72 = sphi 0, %s72
      %s74 = sphi 0, %s72
      %s75 = sphi 0, %s74
      %s89 = sphi 0, %s75
      %s93 = sphi 0, %s93
      %s95 = sphi 0, %s93
      %s96 = sphi 0, %s95
      %s110 = sphi 0, %s96
      %s116 = sphi 0, %s118
      %s119 = sphi 0, %s116
      %s120 = sphi 0, %s119
      %s136 = sphi 0, %s120
    $region4: #{tpu_custom_call.1} parent=1 // loop_header_branch
      %20 = sbr.rel (%p18) target = $region8
    $region5: #{tpu_custom_call.1} parent=1 // loop_body
      %s22 = ssub.s32 %s17, 1
      %s23 = ssub.s32 %s17, 2
      %s24 = sadd.s32 %s17, 1
      %s25 = ssub.s32 %s17, %s24
      %p26 = scmp.eq.s32.totalorder %s25, 0
      %s28 = sadd.s32 %s27, 1
      %s29 = scalar_select %p26, %s27, %s28
      %p32 = pneg %p26
      %p33 = scmp.eq.s32.totalorder %s17, 1
      %p34 = por %p32, %p33
      %p35 = scmp.ne.s32.totalorder %s27, %s30
      %p36 = scmp.eq.s32.totalorder %s17, 0
      %p37 = por %p35, %p36
      %p38 = scmp.ne.s32.totalorder %s27, %s30
      %p39 = scmp.eq.s32.totalorder %s22, 1
      %p40 = por %p38, %p39
      %p41 = scmp.ne.s32.totalorder %s30, %s31
      %p42 = scmp.eq.s32.totalorder %s22, 0
      %p43 = por %p41, %p42
      %p44 = scmp.ne.s32.totalorder %s30, %s31
      %p45 = scmp.eq.s32.totalorder %s23, 1
      %p46 = por %p44, %p45
      %p48 = scmp.ne.s32.totalorder %s31, %s47
      %p49 = scmp.eq.s32.totalorder %s23, 0
      %p50 = por %p48, %p49
      %s52 = sadd.s32 %s51, 1
      %p55 = scmp.eq.s32.totalorder %s17, 1
      %p56 = scmp.ne.s32.totalorder %s51, %s53
      %p57 = scmp.eq.s32.totalorder %s17, 0
      %p58 = por %p56, %p57
      %p59 = scmp.ne.s32.totalorder %s51, %s53
      %p60 = scmp.eq.s32.totalorder %s22, 1
      %p61 = por %p59, %p60
      %p62 = scmp.ne.s32.totalorder %s53, %s54
      %p63 = scmp.eq.s32.totalorder %s22, 0
      %p64 = por %p62, %p63
      %p65 = scmp.ne.s32.totalorder %s53, %s54
      %p66 = scmp.eq.s32.totalorder %s23, 1
      %p67 = por %p65, %p66
      %p69 = scmp.ne.s32.totalorder %s54, %s68
      %p70 = scmp.eq.s32.totalorder %s23, 0
      %p71 = por %p69, %p70
      %s73 = sadd.s32 %s72, 1
      %p76 = scmp.eq.s32.totalorder %s17, 1
      %p77 = scmp.ne.s32.totalorder %s72, %s74
      %p78 = scmp.eq.s32.totalorder %s17, 0
      %p79 = por %p77, %p78
      %p80 = scmp.ne.s32.totalorder %s72, %s74
      %p81 = scmp.eq.s32.totalorder %s22, 1
      %p82 = por %p80, %p81
      %p83 = scmp.ne.s32.totalorder %s74, %s75
      %p84 = scmp.eq.s32.totalorder %s22, 0
      %p85 = por %p83, %p84
      %p86 = scmp.ne.s32.totalorder %s74, %s75
      %p87 = scmp.eq.s32.totalorder %s23, 1
      %p88 = por %p86, %p87
      %p90 = scmp.ne.s32.totalorder %s75, %s89
      %p91 = scmp.eq.s32.totalorder %s23, 0
      %p92 = por %p90, %p91
      %s94 = sadd.s32 %s93, 1
      %p97 = scmp.eq.s32.totalorder %s17, 1
      %p98 = scmp.ne.s32.totalorder %s93, %s95
      %p99 = scmp.eq.s32.totalorder %s17, 0
      %p100 = por %p98, %p99
      %p101 = scmp.ne.s32.totalorder %s93, %s95
      %p102 = scmp.eq.s32.totalorder %s22, 1
      %p103 = por %p101, %p102
      %p104 = scmp.ne.s32.totalorder %s95, %s96
      %p105 = scmp.eq.s32.totalorder %s22, 0
      %p106 = por %p104, %p105
      %p107 = scmp.ne.s32.totalorder %s95, %s96
      %p108 = scmp.eq.s32.totalorder %s23, 1
      %p109 = por %p107, %p108
      %p111 = scmp.ne.s32.totalorder %s96, %s110
      %p112 = scmp.eq.s32.totalorder %s23, 0
      %p113 = por %p111, %p112
      %s114 = ssub.s32 %s17, %s24
      %p115 = scmp.eq.s32.totalorder %s114, 0
      %s117 = sadd.s32 %s116, 1
      %s118 = scalar_select %p115, %s116, %s117
      %p121 = pneg %p115
      %p122 = scmp.eq.s32.totalorder %s17, 1
      %p123 = por %p121, %p122
      %p124 = scmp.ne.s32.totalorder %s116, %s119
      %p125 = scmp.eq.s32.totalorder %s17, 0
      %p126 = por %p124, %p125
      %p127 = scmp.ne.s32.totalorder %s116, %s119
      %p128 = scmp.eq.s32.totalorder %s22, 1
      %p129 = por %p127, %p128
      %p130 = scmp.ne.s32.totalorder %s119, %s120
      %p131 = scmp.eq.s32.totalorder %s22, 0
      %p132 = por %p130, %p131
      %p133 = scmp.ne.s32.totalorder %s119, %s120
      %p134 = scmp.eq.s32.totalorder %s23, 1
      %p135 = por %p133, %p134
      %p137 = scmp.ne.s32.totalorder %s120, %s136
      %p138 = scmp.eq.s32.totalorder %s23, 0
      %p139 = por %p137, %p138
      %p140 = scmp.le.s32.totalorder 1, %s17
      %p141 = scmp.lt.s32.totalorder %s17, 3
      %p142 = pnand %p140, %p141
      %p143 = pneg %p142
      // Predicated region
      $region9: #{tpu_custom_call.1} parent=5 // pred_check
        _
      $region10: #{tpu_custom_call.1} parent=5 // pred_check_branch
        %145 = sbr.rel (%p142) target = $region12
      $region11: #{tpu_custom_call.1} parent=5 // pred_region
        %s146 = ssub.s32 %s17, 1
        // Predicated region
        $region13: #{tpu_custom_call.1} parent=11 // pred_check
          %p147 = pneg %p64
        $region14: #{tpu_custom_call.1} parent=11 // pred_check_branch
          %149 = sbr.rel (%p147) target = $region16
        $region15: #{tpu_custom_call.1} parent=11 // pred_region
          _
        $region16: #{tpu_custom_call.1} parent=11 // pred_fallthru
          _
        // Predicated region
        $region17: #{tpu_custom_call.1} parent=11 // pred_check
          %p150 = pneg %p85
        $region18: #{tpu_custom_call.1} parent=11 // pred_check_branch
          %152 = sbr.rel (%p150) target = $region20
        $region19: #{tpu_custom_call.1} parent=11 // pred_region
          %s154 = ssub.s32 1024, 1024
          %155 = vsyncadd [#allocation6], %s154
          %s156 = sshll.u32 [#allocation5], 4
          %s157 = int_to_ptr.vmem [resolvable:$true] %s156
          %162 = dma.hbm_to_vmem [thread:$0]  %s2, 1024, %s157, [#allocation6], 64, 64, 4
        $region20: #{tpu_custom_call.1} parent=11 // pred_fallthru
          _
        // Predicated region
        $region21: #{tpu_custom_call.1} parent=11 // pred_check
          %p163 = pneg %p106
        $region22: #{tpu_custom_call.1} parent=11 // pred_check_branch
          %165 = sbr.rel (%p163) target = $region24
        $region23: #{tpu_custom_call.1} parent=11 // pred_region
          _
        $region24: #{tpu_custom_call.1} parent=11 // pred_fallthru
          _
      $region12: #{tpu_custom_call.1} parent=5 // pred_fallthru
        _
      %p166 = scmp.lt.s32.totalorder %s17, 2
      // Predicated region
      $region25: #{tpu_custom_call.1} parent=5 // pred_check
        %p167 = pneg %p166
      $region26: #{tpu_custom_call.1} parent=5 // pred_check_branch
        %169 = sbr.rel (%p167) target = $region28
      $region27: #{tpu_custom_call.1} parent=5 // pred_region
        // Predicated region
        $region29: #{tpu_custom_call.1} parent=27 // pred_check
          %p170 = pneg %p37
        $region30: #{tpu_custom_call.1} parent=27 // pred_check_branch
          %172 = sbr.rel (%p170) target = $region32
        $region31: #{tpu_custom_call.1} parent=27 // pred_region
          %s173 = sand.u32 %s27, 1
          %s174 = scalar_lea.sflag [#allocation3], %s173
          %s175 = sand.u32 %s27, 1
          %s176 = smul.addr %s175, 8
          %s177 = scalar_lea.vmem [#allocation2], %s176
          %s179 = ssub.s32 128, 128
          %180 = vsyncadd %s174, %s179
          %s181 = smul.addr %s17, 128
          %s182 = scalar_lea.hbm %s0, %s181
          %s184 = sshll.u32 %s177, 4
          %s185 = int_to_ptr.vmem [resolvable:$true] %s184
          %187 = dma.hbm_to_vmem [thread:$0]  %s182, 128, %s185, %s174
        $region32: #{tpu_custom_call.1} parent=27 // pred_fallthru
          _
      $region28: #{tpu_custom_call.1} parent=5 // pred_fallthru
        _
      %p188 = scmp.le.s32.totalorder 1, %s17
      %p189 = scmp.lt.s32.totalorder %s17, 3
      %p190 = pnand %p188, %p189
      %p191 = pneg %p190
      // Predicated region
      $region33: #{tpu_custom_call.1} parent=5 // pred_check
        _
      $region34: #{tpu_custom_call.1} parent=5 // pred_check_branch
        %193 = sbr.rel (%p190) target = $region36
      $region35: #{tpu_custom_call.1} parent=5 // pred_region
        %s194 = ssub.s32 %s17, 1
        %s195 = sand.u32 %s30, 1
        %s196 = scalar_lea.sflag [#allocation3], %s195
        %s197 = sand.u32 %s30, 1
        %s198 = smul.addr %s197, 8
        %s199 = scalar_lea.vmem [#allocation2], %s198
        // Predicated region
        $region37: #{tpu_custom_call.1} parent=35 // pred_check
          %p200 = pneg %p43
        $region38: #{tpu_custom_call.1} parent=35 // pred_check_branch
          %202 = sbr.rel (%p200) target = $region40
        $region39: #{tpu_custom_call.1} parent=35 // pred_region
          %203 = dma.done %s196, 128
        $region40: #{tpu_custom_call.1} parent=35 // pred_fallthru
          _
        // Predicated region
        $region41: #{tpu_custom_call.1} parent=35 // pred_check
          %p204 = pneg %p85
        $region42: #{tpu_custom_call.1} parent=35 // pred_check_branch
          %206 = sbr.rel (%p204) target = $region44
        $region43: #{tpu_custom_call.1} parent=35 // pred_region
          %207 = dma.done [#allocation6], 1024
        $region44: #{tpu_custom_call.1} parent=35 // pred_fallthru
          _
        %s208 = sand.u32 %s30, 1
        %s209 = scalar_lea.sflag [#allocation3], %s208
        %s210 = sand.u32 %s30, 1
        %s211 = smul.addr %s210, 8
        %s212 = scalar_lea.vmem [#allocation2], %s211
        %p213 = pneg %p43
        %p214 = pneg %p40
        %p215 = pneg %p64
        %p216 = pneg %p61
        %p217 = pneg %p85
        %p218 = pneg %p82
        %p219 = pneg %p106
        %p220 = pneg %p103
        %p221 = pneg %p132
        %p222 = pneg %p129
        %s223 = sand.u32 %s119, 1
        %s224 = scalar_lea.sflag [#allocation4], %s223
        %s225 = sand.u32 %s119, 1
        %s226 = smul.addr %s225, 8
        %s227 = scalar_lea.vmem [#allocation7], %s226
        %v229 = vld [vmem:[%s199] sm:$0xff]
        %230 = vadd.xlane.f32.xlu0 %v229
        %v231 = vpop.xlane.xlu0 %230
        %v232 = vrcp.pop 128.0
        %v233 = vmul.f32 %v231, %v232
        %v234 = vsub.f32 %v229, %v233
        %v235 = vmul.f32 %v234, %v234
        %236 = vadd.xlane.f32.xlu0 %v235
        %v237 = vpop.xlane.xlu0 %236
        %v238 = vmul.f32 %v237, 0.007874016
        %v239 = vrsqrt.pop %v238
        %v240 = vmul.f32 %v238, %v239
        %vm241 = vcmp.eq.f32.partialorder %v238, inf
        %v242 = vsel %vm241, %v238, %v240
        %vm243 = vcmp.eq.f32.partialorder %v238, 0.0
        %v244 = vand.u32 %v238, 2147483648
        %v245 = vsel %vm243, %v244, %v242
        %v246 = vadd.f32 %v245, 1e-06
        %v247 = vrcp.pop %v246
        %v248 = vld [vmem:[%s1] sm:$0x1]
        %v250 = vlaneseq
        %v251 = vshrl.u32 %v250, 7
        %v252 = vsub.s32 0, %v251
        %v253 = vrot.slane %v248, %v252
        %v255 = vmul.f32 %v253, %v247
        %v256 = vmul.f32 %v255, %v234
        %v257 = vpack.c.bf16 %v256, %v256
        %v258 = vld [vmem:[#allocation5] sm:$0xf]
        %v259 = vld [vmem:[#allocation5 + $0x4] sm:$0xf]
        %v260 = vld [vmem:[#allocation5 + $0x8] sm:$0xf]
        %v261 = vld [vmem:[#allocation5 + $0xc] sm:$0xf]
        %v262 = vld [vmem:[#allocation5 + $0x10] sm:$0xf]
        %v263 = vld [vmem:[#allocation5 + $0x14] sm:$0xf]
        %v264 = vld [vmem:[#allocation5 + $0x18] sm:$0xf]
        %v265 = vld [vmem:[#allocation5 + $0x1c] sm:$0xf]
        %v266 = vld [vmem:[#allocation5 + $0x20] sm:$0xf]
        %v267 = vld [vmem:[#allocation5 + $0x24] sm:$0xf]
        %v268 = vld [vmem:[#allocation5 + $0x28] sm:$0xf]
        %v269 = vld [vmem:[#allocation5 + $0x2c] sm:$0xf]
        %v270 = vld [vmem:[#allocation5 + $0x30] sm:$0xf]
        %v271 = vld [vmem:[#allocation5 + $0x34] sm:$0xf]
        %v272 = vld [vmem:[#allocation5 + $0x38] sm:$0xf]
        %v273 = vld [vmem:[#allocation5 + $0x3c] sm:$0xf]
        %v274 = vld [vmem:[%s3] sm:$0x1]
        %v276 = vlaneseq
        %v277 = vshrl.u32 %v276, 7
        %v278 = vsub.s32 0, %v277
        %v279 = vrot.slane %v274, %v278
        %v297 = vunpack.c.l.b16 %v258
        %v298 = vunpack.c.l.b16 %v259
        %v299 = vunpack.c.l.b16 %v260
        %v300 = vunpack.c.l.b16 %v261
        %v301 = vunpack.c.l.b16 %v262
        %v302 = vunpack.c.l.b16 %v263
        %v303 = vunpack.c.l.b16 %v264
        %v304 = vunpack.c.l.b16 %v265
        %v305 = vunpack.c.l.b16 %v266
        %v306 = vunpack.c.l.b16 %v267
        %v307 = vunpack.c.l.b16 %v268
        %v308 = vunpack.c.l.b16 %v269
        %v309 = vunpack.c.l.b16 %v270
        %v310 = vunpack.c.l.b16 %v271
        %v311 = vunpack.c.l.b16 %v272
        %v312 = vunpack.c.l.b16 %v273
        %v313 = vpack.c.b16 %v298, %v297
        %v314 = vpack.c.b16 %v300, %v299
        %v315 = vpack.c.b16 %v302, %v301
        %v316 = vpack.c.b16 %v304, %v303
        %v317 = vpack.c.b16 %v306, %v305
        %v318 = vpack.c.b16 %v308, %v307
        %v319 = vpack.c.b16 %v310, %v309
        %v320 = vpack.c.b16 %v312, %v311
        %329 = vmatprep.subr.bf16.mxu0 0
        %330 = vmatpush1.bf16.msra.mxu0 %v313
        %331 = vmatprep.subr.bf16.mxu0 0
        %332 = vmatpush1.bf16.msra.mxu0 %v314
        %333 = vmatprep.subr.bf16.mxu0 0
        %334 = vmatpush1.bf16.msra.mxu0 %v315
        %335 = vmatprep.subr.bf16.mxu0 0
        %336 = vmatpush1.bf16.msra.mxu0 %v316
        %337 = vmatprep.subr.bf16.mxu0 0
        %338 = vmatpush1.bf16.msra.mxu0 %v317
        %339 = vmatprep.subr.bf16.mxu0 0
        %340 = vmatpush1.bf16.msra.mxu0 %v318
        %341 = vmatprep.subr.bf16.mxu0 0
        %342 = vmatpush1.bf16.msra.mxu0 %v319
        %343 = vmatprep.subr.bf16.mxu0 0
        %344 = vmatpush1.bf16.msra.mxu0 %v320
        %345 = vmatprep.subr.bf16.mxu0 0
        %346 = vmatpush1.bf16.msra.mxu0 0
        %347 = vmatprep.subr.bf16.mxu0 0
        %348 = vmatpush1.bf16.msra.mxu0 0
        %349 = vmatprep.subr.bf16.mxu0 0
        %350 = vmatpush1.bf16.msra.mxu0 0
        %351 = vmatprep.subr.bf16.mxu0 0
        %352 = vmatpush1.bf16.msra.mxu0 0
        %353 = vmatprep.subr.bf16.mxu0 0
        %354 = vmatpush1.bf16.msra.mxu0 0
        %355 = vmatprep.subr.bf16.mxu0 0
        %356 = vmatpush1.bf16.msra.mxu0 0
        %357 = vmatprep.subr.bf16.mxu0 0
        %358 = vmatpush1.bf16.msra.mxu0 0
        %359 = vmatprep.subr.bf16.mxu0 0
        %360 = vmatpush1.bf16.msra.mxu0 0
        %361 = vmatprep.mubr.bf16.mxu0 0
        %362 = vmatmul.mubr.bf16.gmra.mrb[0].mxu0 %v257
        %v363 = vpop.f32.mrb[0].mxu0
        %v364 = vadd.f32 %v279, %v363
        %v365 = vpop.f32.mrb[0].mxu0
        %v366 = vpop.f32.mrb[0].mxu0
        %v367 = vpop.f32.mrb[0].mxu0
        %368 = vdwg.mxu0
        %v369 = vadd.f32 %v229, %v364
        %370 = vst [vmem:[%s227] sm:$0xff] %v369
        %s371 = sand.u32 %s119, 1
        %s372 = scalar_lea.sflag [#allocation4], %s371
        %s373 = sand.u32 %s119, 1
        %s374 = smul.addr %s373, 8
        %s375 = scalar_lea.vmem [#allocation7], %s374
        // Predicated region
        $region45: #{tpu_custom_call.1} parent=35 // pred_check
          %p376 = pneg %p129
        $region46: #{tpu_custom_call.1} parent=35 // pred_check_branch
          %378 = sbr.rel (%p376) target = $region48
        $region47: #{tpu_custom_call.1} parent=35 // pred_region
          %s380 = ssub.s32 128, 128
          %381 = vsyncadd %s372, %s380
          %s382 = smul.addr %s22, 128
          %s383 = scalar_lea.hbm %s4, %s382
          %s385 = sshll.u32 %s375, 4
          %s386 = int_to_ptr.vmem [resolvable:$true] %s385
          %388 = dma.vmem_to_hbm [thread:$0]  %s386, 128, %s383, %s372
        $region48: #{tpu_custom_call.1} parent=35 // pred_fallthru
          _
      $region36: #{tpu_custom_call.1} parent=5 // pred_fallthru
        _
      %p389 = scmp.le.s32.totalorder 2, %s17
      // Predicated region
      $region49: #{tpu_custom_call.1} parent=5 // pred_check
        %p390 = pneg %p389
      $region50: #{tpu_custom_call.1} parent=5 // pred_check_branch
        %392 = sbr.rel (%p390) target = $region52
      $region51: #{tpu_custom_call.1} parent=5 // pred_region
        %s393 = ssub.s32 %s17, 2
        // Predicated region
        $region53: #{tpu_custom_call.1} parent=51 // pred_check
          %p394 = pneg %p135
        $region54: #{tpu_custom_call.1} parent=51 // pred_check_branch
          %396 = sbr.rel (%p394) target = $region56
        $region55: #{tpu_custom_call.1} parent=51 // pred_region
          %s397 = sand.u32 %s120, 1
          %s398 = scalar_lea.sflag [#allocation4], %s397
          %s399 = sand.u32 %s120, 1
          %s400 = smul.addr %s399, 8
          %s401 = scalar_lea.vmem [#allocation7], %s400
          %402 = dma.done %s398, 128
        $region56: #{tpu_custom_call.1} parent=51 // pred_fallthru
          _
      $region52: #{tpu_custom_call.1} parent=5 // pred_fallthru
        _
    $region6: #{tpu_custom_call.1} parent=1 // loop_footer
      %s21 = sadd.s32 1, %s17
    $region7: #{tpu_custom_call.1} parent=1 // loop_footer_branch
      %16 = sbr.rel target = $region3
    $region8: #{tpu_custom_call.1} parent=1 // loop_exit
      _
    %403 = vsyncpa [#allocation3], 1
    %s404 = scalar_lea.sflag [#allocation3], 1
    %405 = vsyncpa %s404, 1
    %406 = vsyncpa [#allocation6], 1
    %407 = vsyncpa [#allocation4], 1
    %s408 = scalar_lea.sflag [#allocation4], 1
    %409 = vsyncpa %s408, 1

</llo_original>
